<compile_context>
chip_gen: v7x
topology: tpu7x:2x2x1
jax: 0.10.0
libtpu: 0.0.40
codegen_flags: <defaults>
</compile_context>

<pallas_src>
import functools

import jax
import jax.numpy as jnp
from jax.experimental import pallas as pl
from jax.experimental.pallas import tpu as pltpu

INPUT_DIM = 28 * 28   # 784
HIDDEN = 100
NUM_CLASSES = 10
HIDDEN_PAD = 128      # lane-aligned hidden width
CLASS_PAD = 128       # lane-dense logits / output width
_SUBLANE = 8
_NEG_BIG = -1e30      # pre-baked class mask (in padded b3 lanes)


def mlp_kernel(x_ref, w1_ref, b1_ref, w2_ref, b2_ref, w3_ref, b3_ref, o_ref):
    # x:(TB,784) f32     w1:(784,128) bf16   b1:(1,128) f32
    # w2:(128,128) bf16  b2:(1,128) f32      w3:(128,128) bf16  b3:(1,128) f32
    # o:(TB,128) f32
    # Cast x to bf16 in-kernel (saves a separate wrapper-side HBM pass over x).
    x = x_ref[...].astype(jnp.bfloat16)
    h1 = jnp.dot(x, w1_ref[...],
                 preferred_element_type=jnp.float32) + b1_ref[...]
    h1 = jnp.maximum(h1, 0.0)

    h2 = jnp.dot(h1.astype(jnp.bfloat16), w2_ref[...],
                 preferred_element_type=jnp.float32) + b2_ref[...]
    h2 = jnp.maximum(h2, 0.0)

    # b3 already holds -1e30 in the padded class lanes, so padded logits are
    # hugely negative and contribute exp(...) == 0 to the softmax — no mask op.
    logits = jnp.dot(h2.astype(jnp.bfloat16), w3_ref[...],
                     preferred_element_type=jnp.float32) + b3_ref[...]

    # Numerically stable softmax over the class dim; divide on the EUP.
    m = jnp.max(logits, axis=-1, keepdims=True)
    e = jnp.exp(logits - m)
    inv = pl.reciprocal(jnp.sum(e, axis=-1, keepdims=True), approx=True)
    o_ref[...] = (e * inv).astype(o_ref.dtype)


def _round_up(n, m):
    return (n + m - 1) // m * m


def _cdiv(a, b):
    return -(-a // b)


@functools.partial(jax.jit, static_argnames=("block_batch",))
def mnist_mlp_forward(x_nchw, packed_params, *, block_batch=4096):
    """x_nchw: (B, 1, 28, 28) float32 -> class probabilities (B, 10) float32."""
    w1, b1, w2, b2, w3, b3 = packed_params  # pre-padded, weights bf16, biases f32
    B = x_nchw.shape[0]
    x = x_nchw.reshape(B, INPUT_DIM)        # nn.Flatten; stays f32 (kernel casts)

    # --- batch tile selection ------------------------------------------------
    # * at least cdiv(B, block_batch) steps,
    # * >=2 steps when B is big enough (keeps both v7x TensorCores busy),
    # * tb derived from the step count so padding waste stays small,
    # * tb always a multiple of 8 (sublane divisibility for the BlockSpec).
    n_steps = _cdiv(B, block_batch)
    if B >= 2 * _SUBLANE and n_steps < 2:
        n_steps = 2
    tb = _round_up(_cdiv(B, n_steps), _SUBLANE)
    b_pad = _round_up(B, tb)
    if b_pad != B:
        x = jnp.pad(x, ((0, b_pad - B), (0, 0)))

    # --- VMEM budget: double-buffered f32 x/out tiles + resident bf16 weights
    #     + headroom for f32/bf16 intermediates. Clamped below v7x's 64 MiB
    #     physical VMEM; also lifts v5e's 16 MiB default scoped limit if needed.
    vmem_bytes = int(
        2 * tb * INPUT_DIM * 4                                        # x tiles (f32, dbl-buf)
        + 2 * tb * CLASS_PAD * 4                                      # out tiles (f32, dbl-buf)
        + 2 * (INPUT_DIM * HIDDEN_PAD + 2 * HIDDEN_PAD * HIDDEN_PAD) * 2  # bf16 weights
        + 2 * 3 * HIDDEN_PAD * 4                                      # biases
        + 8 * tb * HIDDEN_PAD * 4                                     # intermediates headroom
        + (2 << 20)                                                   # slack
    )
    vmem_bytes = min(max(vmem_bytes, 16 << 20), 56 << 20)

    const2d = lambda shape: pl.BlockSpec(shape, lambda i: (0, 0))

    out = pl.pallas_call(
        mlp_kernel,
        out_shape=jax.ShapeDtypeStruct((b_pad, CLASS_PAD), jnp.float32),
        grid=(b_pad // tb,),
        in_specs=[
            pl.BlockSpec((tb, INPUT_DIM), lambda i: (i, 0)),
            const2d(w1.shape), const2d(b1.shape),
            const2d(w2.shape), const2d(b2.shape),
            const2d(w3.shape), const2d(b3.shape),
        ],
        out_specs=pl.BlockSpec((tb, CLASS_PAD), lambda i: (i, 0)),
        compiler_params=pltpu.CompilerParams(
            dimension_semantics=("parallel",),
            vmem_limit_bytes=vmem_bytes),
    )(x, w1, b1, w2, b2, w3, b3)

    return out[:B, :NUM_CLASSES]


def init_params(key):
    """PyTorch nn.Linear default init: U(-1/sqrt(fan_in), +1/sqrt(fan_in))."""
    def linear(k, fan_in, fan_out):
        kw, kb = jax.random.split(k)
        bound = 1.0 / jnp.sqrt(fan_in)
        w = jax.random.uniform(kw, (fan_in, fan_out), jnp.float32, -bound, bound)
        b = jax.random.uniform(kb, (fan_out,), jnp.float32, -bound, bound)
        return w, b

    k1, k2, k3 = jax.random.split(key, 3)
    w1, b1 = linear(k1, INPUT_DIM, HIDDEN)
    w2, b2 = linear(k2, HIDDEN, HIDDEN)
    w3, b3 = linear(k3, HIDDEN, NUM_CLASSES)
    return (w1, b1, w2, b2, w3, b3)


def pack_params(params):
    """Pad hidden 100->128 (zeros) and classes 10->128; weights -> bf16.
    Padded hidden units get zero weight AND zero bias (ReLU keeps them inert).
    Padded class lanes get bias -1e30, which bakes the softmax mask into b3."""
    w1, b1, w2, b2, w3, b3 = params
    ph = HIDDEN_PAD - HIDDEN
    pc = CLASS_PAD - NUM_CLASSES
    w1p = jnp.pad(w1, ((0, 0), (0, ph))).astype(jnp.bfloat16)
    b1p = jnp.pad(b1, ((0, ph),)).reshape(1, HIDDEN_PAD).astype(jnp.float32)
    w2p = jnp.pad(w2, ((0, ph), (0, ph))).astype(jnp.bfloat16)
    b2p = jnp.pad(b2, ((0, ph),)).reshape(1, HIDDEN_PAD).astype(jnp.float32)
    w3p = jnp.pad(w3, ((0, ph), (0, pc))).astype(jnp.bfloat16)
    b3p = jnp.pad(b3, ((0, pc),),
                  constant_values=_NEG_BIG).reshape(1, CLASS_PAD).astype(jnp.float32)
    return (w1p, b1p, w2p, b2p, w3p, b3p)


def reference_forward(x_nchw, params):
    """Pure-JAX reference mirroring the kernel numerics (bf16 operands, f32 acc)."""
    w1, b1, w2, b2, w3, b3 = params
    x = x_nchw.reshape(x_nchw.shape[0], -1).astype(jnp.bfloat16)
    w1b, w2b, w3b = (w.astype(jnp.bfloat16) for w in (w1, w2, w3))
    h1 = jnp.maximum(
        jnp.dot(x, w1b, preferred_element_type=jnp.float32) + b1, 0.0)
    h2 = jnp.maximum(
        jnp.dot(h1.astype(jnp.bfloat16), w2b,
                preferred_element_type=jnp.float32) + b2, 0.0)
    logits = jnp.dot(h2.astype(jnp.bfloat16), w3b,
                     preferred_element_type=jnp.float32) + b3
    return jax.nn.softmax(logits, axis=1)


if __name__ == "__main__":
    key = jax.random.PRNGKey(0)
    kx, kp = jax.random.split(key)

    # Small, MNIST-consistent input: batch=2, NCHW (2, 1, 28, 28).
    x = jax.random.normal(kx, (2, 1, 28, 28), jnp.float32)
    params = init_params(kp)
    packed = pack_params(params)

    out = mnist_mlp_forward(x, packed, block_batch=4096)
    out = jax.block_until_ready(out)

    ref = reference_forward(x, params)
    assert out.shape == (2, NUM_CLASSES)
    assert jnp.allclose(out, ref, atol=2e-3, rtol=2e-3), \
        float(jnp.max(jnp.abs(out - ref)))
    assert jnp.allclose(jnp.sum(out, axis=1), 1.0, atol=2e-3)

    print("KERNEL_OK")
</pallas_src>

<mosaic_0001>
module attributes {stable_mosaic.version = 11 : i64} {
  func.func @mlp_kernel(%arg0: i32, %arg1: memref<8x784xf32, #tpu.memory_space<vmem>>, %arg2: memref<784x128xbf16, #tpu.memory_space<vmem>>, %arg3: memref<1x128xf32, #tpu.memory_space<vmem>>, %arg4: memref<128x128xbf16, #tpu.memory_space<vmem>>, %arg5: memref<1x128xf32, #tpu.memory_space<vmem>>, %arg6: memref<128x128xbf16, #tpu.memory_space<vmem>>, %arg7: memref<1x128xf32, #tpu.memory_space<vmem>>, %arg8: memref<8x128xf32, #tpu.memory_space<vmem>>) attributes {dimension_semantics = [#tpu.dimension_semantics<parallel>], iteration_bounds = array<i64: 1>, scalar_prefetch = 0 : i64, scratch_operands = 0 : i64, tpu.core_type = #tpu.core_type<tc>, window_params = [{transform_indices = @transform_0, window_bounds = array<i64: 8, 784>}, {pipeline_mode = #tpu.pipeline_mode<synchronous>, transform_indices = @transform_1, window_bounds = array<i64: 784, 128>}, {pipeline_mode = #tpu.pipeline_mode<synchronous>, transform_indices = @transform_2, window_bounds = array<i64: 1, 128>}, {pipeline_mode = #tpu.pipeline_mode<synchronous>, transform_indices = @transform_3, window_bounds = array<i64: 128, 128>}, {pipeline_mode = #tpu.pipeline_mode<synchronous>, transform_indices = @transform_4, window_bounds = array<i64: 1, 128>}, {pipeline_mode = #tpu.pipeline_mode<synchronous>, transform_indices = @transform_5, window_bounds = array<i64: 128, 128>}, {pipeline_mode = #tpu.pipeline_mode<synchronous>, transform_indices = @transform_6, window_bounds = array<i64: 1, 128>}, {transform_indices = @transform_7, window_bounds = array<i64: 8, 128>}]} {
    %c0 = arith.constant 0 : index
    %c0_0 = arith.constant 0 : index
    %0 = vector.load %arg1[%c0, %c0_0] : memref<8x784xf32, #tpu.memory_space<vmem>>, vector<8x784xf32>
    %1 = arith.truncf %0 : vector<8x784xf32> to vector<8x784xbf16>
    %c0_1 = arith.constant 0 : index
    %c0_2 = arith.constant 0 : index
    %2 = vector.load %arg2[%c0_1, %c0_2] : memref<784x128xbf16, #tpu.memory_space<vmem>>, vector<784x128xbf16>
    %cst = arith.constant dense<0.000000e+00> : vector<8x128xf32>
    %3 = tpu.matmul %1, %2, %cst {dimension_numbers = #tpu.dot_dimension_numbers<[1], [0], [0], [1], [0, 0, 1, 1], [], []>} : vector<8x784xbf16>, vector<784x128xbf16>, vector<8x128xf32> -> vector<8x128xf32>
    %c0_3 = arith.constant 0 : index
    %c0_4 = arith.constant 0 : index
    %4 = vector.load %arg3[%c0_3, %c0_4] : memref<1x128xf32, #tpu.memory_space<vmem>>, vector<1x128xf32>
    %5 = vector.broadcast %4 : vector<1x128xf32> to vector<8x128xf32>
    %6 = arith.addf %3, %5 : vector<8x128xf32>
    %cst_5 = arith.constant 0.000000e+00 : f32
    %7 = vector.broadcast %cst_5 : f32 to vector<8x128xf32>
    %8 = arith.maximumf %6, %7 : vector<8x128xf32>
    %9 = arith.truncf %8 : vector<8x128xf32> to vector<8x128xbf16>
    %c0_6 = arith.constant 0 : index
    %c0_7 = arith.constant 0 : index
    %10 = vector.load %arg4[%c0_6, %c0_7] : memref<128x128xbf16, #tpu.memory_space<vmem>>, vector<128x128xbf16>
    %cst_8 = arith.constant dense<0.000000e+00> : vector<8x128xf32>
    %11 = tpu.matmul %9, %10, %cst_8 {dimension_numbers = #tpu.dot_dimension_numbers<[1], [0], [0], [1], [0, 0, 1, 1], [], []>} : vector<8x128xbf16>, vector<128x128xbf16>, vector<8x128xf32> -> vector<8x128xf32>
    %c0_9 = arith.constant 0 : index
    %c0_10 = arith.constant 0 : index
    %12 = vector.load %arg5[%c0_9, %c0_10] : memref<1x128xf32, #tpu.memory_space<vmem>>, vector<1x128xf32>
    %13 = vector.broadcast %12 : vector<1x128xf32> to vector<8x128xf32>
    %14 = arith.addf %11, %13 : vector<8x128xf32>
    %cst_11 = arith.constant 0.000000e+00 : f32
    %15 = vector.broadcast %cst_11 : f32 to vector<8x128xf32>
    %16 = arith.maximumf %14, %15 : vector<8x128xf32>
    %17 = arith.truncf %16 : vector<8x128xf32> to vector<8x128xbf16>
    %c0_12 = arith.constant 0 : index
    %c0_13 = arith.constant 0 : index
    %18 = vector.load %arg6[%c0_12, %c0_13] : memref<128x128xbf16, #tpu.memory_space<vmem>>, vector<128x128xbf16>
    %cst_14 = arith.constant dense<0.000000e+00> : vector<8x128xf32>
    %19 = tpu.matmul %17, %18, %cst_14 {dimension_numbers = #tpu.dot_dimension_numbers<[1], [0], [0], [1], [0, 0, 1, 1], [], []>} : vector<8x128xbf16>, vector<128x128xbf16>, vector<8x128xf32> -> vector<8x128xf32>
    %c0_15 = arith.constant 0 : index
    %c0_16 = arith.constant 0 : index
    %20 = vector.load %arg7[%c0_15, %c0_16] : memref<1x128xf32, #tpu.memory_space<vmem>>, vector<1x128xf32>
    %21 = vector.broadcast %20 : vector<1x128xf32> to vector<8x128xf32>
    %22 = arith.addf %19, %21 : vector<8x128xf32>
    %cst_17 = arith.constant dense<0xFF800000> : vector<8xf32>
    %23 = vector.multi_reduction <maximumf>, %22, %cst_17 [1] : vector<8x128xf32> to vector<8xf32>
    %24 = vector.shape_cast %23 : vector<8xf32> to vector<8x1xf32>
    %25 = vector.broadcast %24 : vector<8x1xf32> to vector<8x128xf32>
    %26 = arith.subf %22, %25 : vector<8x128xf32>
    %27 = math.exp %26 : vector<8x128xf32>
    %cst_18 = arith.constant dense<0.000000e+00> : vector<8xf32>
    %28 = vector.multi_reduction <add>, %27, %cst_18 [1] : vector<8x128xf32> to vector<8xf32>
    %29 = vector.shape_cast %28 : vector<8xf32> to vector<8x1xf32>
    %30 = tpu.reciprocal %29 {approx = true} : vector<8x1xf32> -> vector<8x1xf32>
    %31 = vector.broadcast %30 : vector<8x1xf32> to vector<8x128xf32>
    %32 = arith.mulf %27, %31 : vector<8x128xf32>
    %c0_19 = arith.constant 0 : index
    %c0_20 = arith.constant 0 : index
    %33 = vector.load %arg8[%c0_19, %c0_20] : memref<8x128xf32, #tpu.memory_space<vmem>>, vector<8x128xf32>
    tpu.vector_store %arg8[%c0_19, %c0_20], %32 {strides = array<i32>} : memref<8x128xf32, #tpu.memory_space<vmem>>, vector<8x128xf32>,
    return
  }
  func.func @transform_0(%arg0: i32) -> (i32, i32) {
    %c0_i32 = arith.constant 0 : i32
    %c0_i32_0 = arith.constant 0 : i32
    return %arg0, %c0_i32 : i32, i32
  }
  func.func @transform_1(%arg0: i32) -> (i32, i32) {
    %c0_i32 = arith.constant 0 : i32
    %c0_i32_0 = arith.constant 0 : i32
    %c0_i32_1 = arith.constant 0 : i32
    return %c0_i32, %c0_i32_0 : i32, i32
  }
  func.func @transform_2(%arg0: i32) -> (i32, i32) {
    %c0_i32 = arith.constant 0 : i32
    %c0_i32_0 = arith.constant 0 : i32
    %c0_i32_1 = arith.constant 0 : i32
    return %c0_i32, %c0_i32_0 : i32, i32
  }
  func.func @transform_3(%arg0: i32) -> (i32, i32) {
    %c0_i32 = arith.constant 0 : i32
    %c0_i32_0 = arith.constant 0 : i32
    %c0_i32_1 = arith.constant 0 : i32
    return %c0_i32, %c0_i32_0 : i32, i32
  }
  func.func @transform_4(%arg0: i32) -> (i32, i32) {
    %c0_i32 = arith.constant 0 : i32
    %c0_i32_0 = arith.constant 0 : i32
    %c0_i32_1 = arith.constant 0 : i32
    return %c0_i32, %c0_i32_0 : i32, i32
  }
  func.func @transform_5(%arg0: i32) -> (i32, i32) {
    %c0_i32 = arith.constant 0 : i32
    %c0_i32_0 = arith.constant 0 : i32
    %c0_i32_1 = arith.constant 0 : i32
    return %c0_i32, %c0_i32_0 : i32, i32
  }
  func.func @transform_6(%arg0: i32) -> (i32, i32) {
    %c0_i32 = arith.constant 0 : i32
    %c0_i32_0 = arith.constant 0 : i32
    %c0_i32_1 = arith.constant 0 : i32
    return %c0_i32, %c0_i32_0 : i32, i32
  }
  func.func @transform_7(%arg0: i32) -> (i32, i32) {
    %c0_i32 = arith.constant 0 : i32
    %c0_i32_0 = arith.constant 0 : i32
    return %arg0, %c0_i32 : i32, i32
  }
}

</mosaic_0001>

<llo_original>
// kernel: mnist_mlp_forward.1
$region0: #{mnist_mlp_forward.1}
  #allocation0 [shape = 'u32[]', space=smem, size = 0x4, offset = 0x4, fixed_abs, tag = 'smem constant byte address 0x4 - core index']
  #allocation1 [shape = 'u32[144,128]{1,0:T(1,128)}', space=vmem, size = 0x12000, scoped, tag = 'internal scratch']
  %s0 = inlined_call_operand.vmem [shape: f32[8,784], index: 0, kind: input, shape index: {}]
  %s1 = inlined_call_operand.hbm [shape: bf16[784,128], index: 1, kind: input, shape index: {}]
  %s2 = inlined_call_operand.vmem [shape: f32[1,128], index: 2, kind: input, shape index: {}]
  %s3 = inlined_call_operand.vmem [shape: bf16[128,128], index: 3, kind: input, shape index: {}]
  %s4 = inlined_call_operand.vmem [shape: f32[1,128], index: 4, kind: input, shape index: {}]
  %s5 = inlined_call_operand.vmem [shape: bf16[128,128], index: 5, kind: input, shape index: {}]
  %s6 = inlined_call_operand.vmem [shape: f32[1,128], index: 6, kind: input, shape index: {}]
  %s7 = inlined_call_operand.vmem [shape: f32[8,128], index: 7, kind: output, shape index: {}]
  %s8 = sld [smem:[#allocation0]]
  $region42: #{mnist_mlp_forward.1} parent=0
    _
  %s10 = ssub.s32 1, %s8
  %s11 = scalar_select 0, %s10, %s8
  $region1: #{mnist_mlp_forward.1} parent=0
    #allocation2 [shape = 'u8[200704]{0}', space=vmem, size = 0x31000, scoped, tag = 'input window, operand 1, single buffered']
    #allocation3 [shape = 's32[1]{0}', space=sflag, size = 0x4, scoped, tag = 'scoped memory for mnist_mlp_forward.1']
    %12 = vsyncpa [#allocation3], 0
    // Predicated region
    $region2: #{mnist_mlp_forward.1} parent=1 // pred_check
      _
    $region3: #{mnist_mlp_forward.1} parent=1 // pred_check_branch
      %14 = sbr.rel (0) target = $region5
    $region4: #{mnist_mlp_forward.1} parent=1 // pred_region
      _
    $region5: #{mnist_mlp_forward.1} parent=1 // pred_fallthru
      _
    // Predicated region
    $region6: #{mnist_mlp_forward.1} parent=1 // pred_check
      _
    $region7: #{mnist_mlp_forward.1} parent=1 // pred_check_branch
      %16 = sbr.rel (0) target = $region9
    $region8: #{mnist_mlp_forward.1} parent=1 // pred_region
      %s18 = ssub.s32 6272, 6272
      %19 = vsyncadd [#allocation3], %s18
      %s20 = sshll.u32 [#allocation2], 4
      %s21 = int_to_ptr.vmem [resolvable:$true] %s20
      %26 = dma.hbm_to_vmem [thread:$0]  %s1, 6272, %s21, [#allocation3], 64, 64, 4
    $region9: #{mnist_mlp_forward.1} parent=1 // pred_fallthru
      _
    // Predicated region
    $region10: #{mnist_mlp_forward.1} parent=1 // pred_check
      _
    $region11: #{mnist_mlp_forward.1} parent=1 // pred_check_branch
      %28 = sbr.rel (0) target = $region13
    $region12: #{mnist_mlp_forward.1} parent=1 // pred_region
      _
    $region13: #{mnist_mlp_forward.1} parent=1 // pred_fallthru
      _
    // Predicated region
    $region14: #{mnist_mlp_forward.1} parent=1 // pred_check
      _
    $region15: #{mnist_mlp_forward.1} parent=1 // pred_check_branch
      %30 = sbr.rel (0) target = $region17
    $region16: #{mnist_mlp_forward.1} parent=1 // pred_region
      _
    $region17: #{mnist_mlp_forward.1} parent=1 // pred_fallthru
      _
    // Predicated region
    $region18: #{mnist_mlp_forward.1} parent=1 // pred_check
      _
    $region19: #{mnist_mlp_forward.1} parent=1 // pred_check_branch
      %32 = sbr.rel (0) target = $region21
    $region20: #{mnist_mlp_forward.1} parent=1 // pred_region
      _
    $region21: #{mnist_mlp_forward.1} parent=1 // pred_fallthru
      _
    // Predicated region
    $region22: #{mnist_mlp_forward.1} parent=1 // pred_check
      _
    $region23: #{mnist_mlp_forward.1} parent=1 // pred_check_branch
      %34 = sbr.rel (0) target = $region25
    $region24: #{mnist_mlp_forward.1} parent=1 // pred_region
      _
    $region25: #{mnist_mlp_forward.1} parent=1 // pred_fallthru
      _
    // Predicated region
    $region26: #{mnist_mlp_forward.1} parent=1 // pred_check
      _
    $region27: #{mnist_mlp_forward.1} parent=1 // pred_check_branch
      %36 = sbr.rel (0) target = $region29
    $region28: #{mnist_mlp_forward.1} parent=1 // pred_region
      _
    $region29: #{mnist_mlp_forward.1} parent=1 // pred_fallthru
      _
    // Predicated region
    $region30: #{mnist_mlp_forward.1} parent=1 // pred_check
      _
    $region31: #{mnist_mlp_forward.1} parent=1 // pred_check_branch
      %38 = sbr.rel (0) target = $region33
    $region32: #{mnist_mlp_forward.1} parent=1 // pred_region
      %39 = dma.done [#allocation3], 6272
    $region33: #{mnist_mlp_forward.1} parent=1 // pred_fallthru
      _
    %v41 = vld [vmem:[%s0] sm:$0xff]
    %v42 = vld [vmem:[%s0 + $0x8] sm:$0xff]
    %v43 = vld [vmem:[%s0 + $0x10] sm:$0xff]
    %v44 = vld [vmem:[%s0 + $0x18] sm:$0xff]
    %v45 = vld [vmem:[%s0 + $0x20] sm:$0xff]
    %v46 = vld [vmem:[%s0 + $0x28] sm:$0xff]
    %v47 = vld [vmem:[%s0 + $0x30] sm:$0xff]
    %v48 = vpack.c.bf16 %v41, %v41
    %v49 = vpack.c.bf16 %v42, %v42
    %v50 = vpack.c.bf16 %v43, %v43
    %v51 = vpack.c.bf16 %v44, %v44
    %v52 = vpack.c.bf16 %v45, %v45
    %v53 = vpack.c.bf16 %v46, %v46
    %v54 = vpack.c.bf16 %v47, %v47
    %v55 = vld [vmem:[#allocation2] sm:$0xf]
    %v56 = vld [vmem:[#allocation2 + $0x4] sm:$0xf]
    %v57 = vld [vmem:[#allocation2 + $0x8] sm:$0xf]
    %v58 = vld [vmem:[#allocation2 + $0xc] sm:$0xf]
    %v59 = vld [vmem:[#allocation2 + $0x10] sm:$0xf]
    %v60 = vld [vmem:[#allocation2 + $0x14] sm:$0xf]
    %v61 = vld [vmem:[#allocation2 + $0x18] sm:$0xf]
    %v62 = vld [vmem:[#allocation2 + $0x1c] sm:$0xf]
    %v63 = vld [vmem:[#allocation2 + $0x20] sm:$0xf]
    %v64 = vld [vmem:[#allocation2 + $0x24] sm:$0xf]
    %v65 = vld [vmem:[#allocation2 + $0x28] sm:$0xf]
    %v66 = vld [vmem:[#allocation2 + $0x2c] sm:$0xf]
    %v67 = vld [vmem:[#allocation2 + $0x30] sm:$0xf]
    %v68 = vld [vmem:[#allocation2 + $0x34] sm:$0xf]
    %v69 = vld [vmem:[#allocation2 + $0x38] sm:$0xf]
    %v70 = vld [vmem:[#allocation2 + $0x3c] sm:$0xf]
    %v71 = vld [vmem:[#allocation2 + $0x40] sm:$0xf]
    %v72 = vld [vmem:[#allocation2 + $0x44] sm:$0xf]
    %v73 = vld [vmem:[#allocation2 + $0x48] sm:$0xf]
    %v74 = vld [vmem:[#allocation2 + $0x4c] sm:$0xf]
    %v75 = vld [vmem:[#allocation2 + $0x50] sm:$0xf]
    %v76 = vld [vmem:[#allocation2 + $0x54] sm:$0xf]
    %v77 = vld [vmem:[#allocation2 + $0x58] sm:$0xf]
    %v78 = vld [vmem:[#allocation2 + $0x5c] sm:$0xf]
    %v79 = vld [vmem:[#allocation2 + $0x60] sm:$0xf]
    %v80 = vld [vmem:[#allocation2 + $0x64] sm:$0xf]
    %v81 = vld [vmem:[#allocation2 + $0x68] sm:$0xf]
    %v82 = vld [vmem:[#allocation2 + $0x6c] sm:$0xf]
    %v83 = vld [vmem:[#allocation2 + $0x70] sm:$0xf]
    %v84 = vld [vmem:[#allocation2 + $0x74] sm:$0xf]
    %v85 = vld [vmem:[#allocation2 + $0x78] sm:$0xf]
    %v86 = vld [vmem:[#allocation2 + $0x7c] sm:$0xf]
    %v87 = vld [vmem:[#allocation2 + $0x80] sm:$0xf]
    %v88 = vld [vmem:[#allocation2 + $0x84] sm:$0xf]
    %v89 = vld [vmem:[#allocation2 + $0x88] sm:$0xf]
    %v90 = vld [vmem:[#allocation2 + $0x8c] sm:$0xf]
    %v91 = vld [vmem:[#allocation2 + $0x90] sm:$0xf]
    %v92 = vld [vmem:[#allocation2 + $0x94] sm:$0xf]
    %v93 = vld [vmem:[#allocation2 + $0x98] sm:$0xf]
    %v94 = vld [vmem:[#allocation2 + $0x9c] sm:$0xf]
    %v95 = vld [vmem:[#allocation2 + $0xa0] sm:$0xf]
    %v96 = vld [vmem:[#allocation2 + $0xa4] sm:$0xf]
    %v97 = vld [vmem:[#allocation2 + $0xa8] sm:$0xf]
    %v98 = vld [vmem:[#allocation2 + $0xac] sm:$0xf]
    %v99 = vld [vmem:[#allocation2 + $0xb0] sm:$0xf]
    %v100 = vld [vmem:[#allocation2 + $0xb4] sm:$0xf]
    %v101 = vld [vmem:[#allocation2 + $0xb8] sm:$0xf]
    %v102 = vld [vmem:[#allocation2 + $0xbc] sm:$0xf]
    %v103 = vld [vmem:[#allocation2 + $0xc0] sm:$0xf]
    %v104 = vld [vmem:[#allocation2 + $0xc4] sm:$0xf]
    %v105 = vld [vmem:[#allocation2 + $0xc8] sm:$0xf]
    %v106 = vld [vmem:[#allocation2 + $0xcc] sm:$0xf]
    %v107 = vld [vmem:[#allocation2 + $0xd0] sm:$0xf]
    %v108 = vld [vmem:[#allocation2 + $0xd4] sm:$0xf]
    %v109 = vld [vmem:[#allocation2 + $0xd8] sm:$0xf]
    %v110 = vld [vmem:[#allocation2 + $0xdc] sm:$0xf]
    %v111 = vld [vmem:[#allocation2 + $0xe0] sm:$0xf]
    %v112 = vld [vmem:[#allocation2 + $0xe4] sm:$0xf]
    %v113 = vld [vmem:[#allocation2 + $0xe8] sm:$0xf]
    %v114 = vld [vmem:[#allocation2 + $0xec] sm:$0xf]
    %v115 = vld [vmem:[#allocation2 + $0xf0] sm:$0xf]
    %v116 = vld [vmem:[#allocation2 + $0xf4] sm:$0xf]
    %v117 = vld [vmem:[#allocation2 + $0xf8] sm:$0xf]
    %v118 = vld [vmem:[#allocation2 + $0xfc] sm:$0xf]
    %v119 = vld [vmem:[#allocation2 + $0x100] sm:$0xf]
    %v120 = vld [vmem:[#allocation2 + $0x104] sm:$0xf]
    %v121 = vld [vmem:[#allocation2 + $0x108] sm:$0xf]
    %v122 = vld [vmem:[#allocation2 + $0x10c] sm:$0xf]
    %v123 = vld [vmem:[#allocation2 + $0x110] sm:$0xf]
    %v124 = vld [vmem:[#allocation2 + $0x114] sm:$0xf]
    %v125 = vld [vmem:[#allocation2 + $0x118] sm:$0xf]
    %v126 = vld [vmem:[#allocation2 + $0x11c] sm:$0xf]
    %v127 = vld [vmem:[#allocation2 + $0x120] sm:$0xf]
    %v128 = vld [vmem:[#allocation2 + $0x124] sm:$0xf]
    %v129 = vld [vmem:[#allocation2 + $0x128] sm:$0xf]
    %v130 = vld [vmem:[#allocation2 + $0x12c] sm:$0xf]
    %v131 = vld [vmem:[#allocation2 + $0x130] sm:$0xf]
    %v132 = vld [vmem:[#allocation2 + $0x134] sm:$0xf]
    %v133 = vld [vmem:[#allocation2 + $0x138] sm:$0xf]
    %v134 = vld [vmem:[#allocation2 + $0x13c] sm:$0xf]
    %v135 = vld [vmem:[#allocation2 + $0x140] sm:$0xf]
    %v136 = vld [vmem:[#allocation2 + $0x144] sm:$0xf]
    %v137 = vld [vmem:[#allocation2 + $0x148] sm:$0xf]
    %v138 = vld [vmem:[#allocation2 + $0x14c] sm:$0xf]
    %v139 = vld [vmem:[#allocation2 + $0x150] sm:$0xf]
    %v140 = vld [vmem:[#allocation2 + $0x154] sm:$0xf]
    %v141 = vld [vmem:[#allocation2 + $0x158] sm:$0xf]
    %v142 = vld [vmem:[#allocation2 + $0x15c] sm:$0xf]
    %v143 = vld [vmem:[#allocation2 + $0x160] sm:$0xf]
    %v144 = vld [vmem:[#allocation2 + $0x164] sm:$0xf]
    %v145 = vld [vmem:[#allocation2 + $0x168] sm:$0xf]
    %v146 = vld [vmem:[#allocation2 + $0x16c] sm:$0xf]
    %v147 = vld [vmem:[#allocation2 + $0x170] sm:$0xf]
    %v148 = vld [vmem:[#allocation2 + $0x174] sm:$0xf]
    %v149 = vld [vmem:[#allocation2 + $0x178] sm:$0xf]
    %v150 = vld [vmem:[#allocation2 + $0x17c] sm:$0xf]
    %v151 = vld [vmem:[#allocation2 + $0x180] sm:$0xf]
    %v152 = vld [vmem:[#allocation2 + $0x184] sm:$0xf]
    %v153 = vld [vmem:[%s2] sm:$0x1]
    %v155 = vlaneseq
    %v156 = vshrl.u32 %v155, 7
    %v157 = vsub.s32 0, %v156
    %v158 = vrot.slane %v153, %v157
    %v258 = vunpack.c.l.b16 %v55
    %v259 = vunpack.c.l.b16 %v56
    %v260 = vunpack.c.l.b16 %v57
    %v261 = vunpack.c.l.b16 %v58
    %v262 = vunpack.c.l.b16 %v59
    %v263 = vunpack.c.l.b16 %v60
    %v264 = vunpack.c.l.b16 %v61
    %v265 = vunpack.c.l.b16 %v62
    %v266 = vunpack.c.l.b16 %v63
    %v267 = vunpack.c.l.b16 %v64
    %v268 = vunpack.c.l.b16 %v65
    %v269 = vunpack.c.l.b16 %v66
    %v270 = vunpack.c.l.b16 %v67
    %v271 = vunpack.c.l.b16 %v68
    %v272 = vunpack.c.l.b16 %v69
    %v273 = vunpack.c.l.b16 %v70
    %v274 = vunpack.c.l.b16 %v71
    %v275 = vunpack.c.l.b16 %v72
    %v276 = vunpack.c.l.b16 %v73
    %v277 = vunpack.c.l.b16 %v74
    %v278 = vunpack.c.l.b16 %v75
    %v279 = vunpack.c.l.b16 %v76
    %v280 = vunpack.c.l.b16 %v77
    %v281 = vunpack.c.l.b16 %v78
    %v282 = vunpack.c.l.b16 %v79
    %v283 = vunpack.c.l.b16 %v80
    %v284 = vunpack.c.l.b16 %v81
    %v285 = vunpack.c.l.b16 %v82
    %v286 = vunpack.c.l.b16 %v83
    %v287 = vunpack.c.l.b16 %v84
    %v288 = vunpack.c.l.b16 %v85
    %v289 = vunpack.c.l.b16 %v86
    %v290 = vunpack.c.l.b16 %v87
    %v291 = vunpack.c.l.b16 %v88
    %v292 = vunpack.c.l.b16 %v89
    %v293 = vunpack.c.l.b16 %v90
    %v294 = vunpack.c.l.b16 %v91
    %v295 = vunpack.c.l.b16 %v92
    %v296 = vunpack.c.l.b16 %v93
    %v297 = vunpack.c.l.b16 %v94
    %v298 = vunpack.c.l.b16 %v95
    %v299 = vunpack.c.l.b16 %v96
    %v300 = vunpack.c.l.b16 %v97
    %v301 = vunpack.c.l.b16 %v98
    %v302 = vunpack.c.l.b16 %v99
    %v303 = vunpack.c.l.b16 %v100
    %v304 = vunpack.c.l.b16 %v101
    %v305 = vunpack.c.l.b16 %v102
    %v306 = vunpack.c.l.b16 %v103
    %v307 = vunpack.c.l.b16 %v104
    %v308 = vunpack.c.l.b16 %v105
    %v309 = vunpack.c.l.b16 %v106
    %v310 = vunpack.c.l.b16 %v107
    %v311 = vunpack.c.l.b16 %v108
    %v312 = vunpack.c.l.b16 %v109
    %v313 = vunpack.c.l.b16 %v110
    %v314 = vunpack.c.l.b16 %v111
    %v315 = vunpack.c.l.b16 %v112
    %v316 = vunpack.c.l.b16 %v113
    %v317 = vunpack.c.l.b16 %v114
    %v318 = vunpack.c.l.b16 %v115
    %v319 = vunpack.c.l.b16 %v116
    %v320 = vunpack.c.l.b16 %v117
    %v321 = vunpack.c.l.b16 %v118
    %v322 = vunpack.c.l.b16 %v119
    %v323 = vunpack.c.l.b16 %v120
    %v324 = vunpack.c.l.b16 %v121
    %v325 = vunpack.c.l.b16 %v122
    %v326 = vunpack.c.l.b16 %v123
    %v327 = vunpack.c.l.b16 %v124
    %v328 = vunpack.c.l.b16 %v125
    %v329 = vunpack.c.l.b16 %v126
    %v330 = vunpack.c.l.b16 %v127
    %v331 = vunpack.c.l.b16 %v128
    %v332 = vunpack.c.l.b16 %v129
    %v333 = vunpack.c.l.b16 %v130
    %v334 = vunpack.c.l.b16 %v131
    %v335 = vunpack.c.l.b16 %v132
    %v336 = vunpack.c.l.b16 %v133
    %v337 = vunpack.c.l.b16 %v134
    %v338 = vunpack.c.l.b16 %v135
    %v339 = vunpack.c.l.b16 %v136
    %v340 = vunpack.c.l.b16 %v137
    %v341 = vunpack.c.l.b16 %v138
    %v342 = vunpack.c.l.b16 %v139
    %v343 = vunpack.c.l.b16 %v140
    %v344 = vunpack.c.l.b16 %v141
    %v345 = vunpack.c.l.b16 %v142
    %v346 = vunpack.c.l.b16 %v143
    %v347 = vunpack.c.l.b16 %v144
    %v348 = vunpack.c.l.b16 %v145
    %v349 = vunpack.c.l.b16 %v146
    %v350 = vunpack.c.l.b16 %v147
    %v351 = vunpack.c.l.b16 %v148
    %v352 = vunpack.c.l.b16 %v149
    %v353 = vunpack.c.l.b16 %v150
    %v354 = vunpack.c.l.b16 %v151
    %v355 = vunpack.c.l.b16 %v152
    %v356 = vpack.c.b16 %v259, %v258
    %v357 = vpack.c.b16 %v261, %v260
    %v358 = vpack.c.b16 %v263, %v262
    %v359 = vpack.c.b16 %v265, %v264
    %v360 = vpack.c.b16 %v267, %v266
    %v361 = vpack.c.b16 %v269, %v268
    %v362 = vpack.c.b16 %v271, %v270
    %v363 = vpack.c.b16 %v273, %v272
    %v364 = vpack.c.b16 %v275, %v274
    %v365 = vpack.c.b16 %v277, %v276
    %v366 = vpack.c.b16 %v279, %v278
    %v367 = vpack.c.b16 %v281, %v280
    %v368 = vpack.c.b16 %v283, %v282
    %v369 = vpack.c.b16 %v285, %v284
    %v370 = vpack.c.b16 %v287, %v286
    %v371 = vpack.c.b16 %v289, %v288
    %v372 = vpack.c.b16 %v291, %v290
    %v373 = vpack.c.b16 %v293, %v292
    %v374 = vpack.c.b16 %v295, %v294
    %v375 = vpack.c.b16 %v297, %v296
    %v376 = vpack.c.b16 %v299, %v298
    %v377 = vpack.c.b16 %v301, %v300
    %v378 = vpack.c.b16 %v303, %v302
    %v379 = vpack.c.b16 %v305, %v304
    %v380 = vpack.c.b16 %v307, %v306
    %v381 = vpack.c.b16 %v309, %v308
    %v382 = vpack.c.b16 %v311, %v310
    %v383 = vpack.c.b16 %v313, %v312
    %v384 = vpack.c.b16 %v315, %v314
    %v385 = vpack.c.b16 %v317, %v316
    %v386 = vpack.c.b16 %v319, %v318
    %v387 = vpack.c.b16 %v321, %v320
    %v388 = vpack.c.b16 %v323, %v322
    %v389 = vpack.c.b16 %v325, %v324
    %v390 = vpack.c.b16 %v327, %v326
    %v391 = vpack.c.b16 %v329, %v328
    %v392 = vpack.c.b16 %v331, %v330
    %v393 = vpack.c.b16 %v333, %v332
    %v394 = vpack.c.b16 %v335, %v334
    %v395 = vpack.c.b16 %v337, %v336
    %v396 = vpack.c.b16 %v339, %v338
    %v397 = vpack.c.b16 %v341, %v340
    %v398 = vpack.c.b16 %v343, %v342
    %v399 = vpack.c.b16 %v345, %v344
    %v400 = vpack.c.b16 %v347, %v346
    %v401 = vpack.c.b16 %v349, %v348
    %v402 = vpack.c.b16 %v351, %v350
    %v403 = vpack.c.b16 %v353, %v352
    %v404 = vpack.c.b16 %v355, %v354
    %vm454 = vcmask 130048
    %v456 = vsel %vm454, %v54, 0
    %458 = vmatprep.subr.bf16.mxu0 0
    %459 = vmatpush1.bf16.msra.mxu0 %v356
    %460 = vmatprep.subr.bf16.mxu0 0
    %461 = vmatpush1.bf16.msra.mxu0 %v357
    %462 = vmatprep.subr.bf16.mxu0 0
    %463 = vmatpush1.bf16.msra.mxu0 %v358
    %464 = vmatprep.subr.bf16.mxu0 0
    %465 = vmatpush1.bf16.msra.mxu0 %v359
    %466 = vmatprep.subr.bf16.mxu0 0
    %467 = vmatpush1.bf16.msra.mxu0 %v360
    %468 = vmatprep.subr.bf16.mxu0 0
    %469 = vmatpush1.bf16.msra.mxu0 %v361
    %470 = vmatprep.subr.bf16.mxu0 0
    %471 = vmatpush1.bf16.msra.mxu0 %v362
    %472 = vmatprep.subr.bf16.mxu0 0
    %473 = vmatpush1.bf16.msra.mxu0 %v363
    %474 = vmatprep.subr.bf16.mxu0 0
    %475 = vmatpush1.bf16.msra.mxu0 %v364
    %476 = vmatprep.subr.bf16.mxu0 0
    %477 = vmatpush1.bf16.msra.mxu0 %v365
    %478 = vmatprep.subr.bf16.mxu0 0
    %479 = vmatpush1.bf16.msra.mxu0 %v366
    %480 = vmatprep.subr.bf16.mxu0 0
    %481 = vmatpush1.bf16.msra.mxu0 %v367
    %482 = vmatprep.subr.bf16.mxu0 0
    %483 = vmatpush1.bf16.msra.mxu0 %v368
    %484 = vmatprep.subr.bf16.mxu0 0
    %485 = vmatpush1.bf16.msra.mxu0 %v369
    %486 = vmatprep.subr.bf16.mxu0 0
    %487 = vmatpush1.bf16.msra.mxu0 %v370
    %488 = vmatprep.subr.bf16.mxu0 0
    %489 = vmatpush1.bf16.msra.mxu0 %v371
    %490 = vmatprep.mubr.bf16.mxu0 %v49
    %491 = vmatmul.mubr.bf16.gmra.mrb[0].mxu0 %v48
    %v492 = vpop.f32.mrb[0].mxu0
    %v493 = vadd.f32 %v158, %v492
    %v494 = vpop.f32.mrb[0].mxu0
    %v495 = vpop.f32.mrb[0].mxu0
    %v496 = vpop.f32.mrb[0].mxu0
    %497 = vdwg.mxu0
    %498 = vmatprep.subr.bf16.mxu0 0
    %499 = vmatpush1.bf16.msra.mxu0 %v372
    %500 = vmatprep.subr.bf16.mxu0 0
    %501 = vmatpush1.bf16.msra.mxu0 %v373
    %502 = vmatprep.subr.bf16.mxu0 0
    %503 = vmatpush1.bf16.msra.mxu0 %v374
    %504 = vmatprep.subr.bf16.mxu0 0
    %505 = vmatpush1.bf16.msra.mxu0 %v375
    %506 = vmatprep.subr.bf16.mxu0 0
    %507 = vmatpush1.bf16.msra.mxu0 %v376
    %508 = vmatprep.subr.bf16.mxu0 0
    %509 = vmatpush1.bf16.msra.mxu0 %v377
    %510 = vmatprep.subr.bf16.mxu0 0
    %511 = vmatpush1.bf16.msra.mxu0 %v378
    %512 = vmatprep.subr.bf16.mxu0 0
    %513 = vmatpush1.bf16.msra.mxu0 %v379
    %514 = vmatprep.subr.bf16.mxu0 0
    %515 = vmatpush1.bf16.msra.mxu0 %v380
    %516 = vmatprep.subr.bf16.mxu0 0
    %517 = vmatpush1.bf16.msra.mxu0 %v381
    %518 = vmatprep.subr.bf16.mxu0 0
    %519 = vmatpush1.bf16.msra.mxu0 %v382
    %520 = vmatprep.subr.bf16.mxu0 0
    %521 = vmatpush1.bf16.msra.mxu0 %v383
    %522 = vmatprep.subr.bf16.mxu0 0
    %523 = vmatpush1.bf16.msra.mxu0 %v384
    %524 = vmatprep.subr.bf16.mxu0 0
    %525 = vmatpush1.bf16.msra.mxu0 %v385
    %526 = vmatprep.subr.bf16.mxu0 0
    %527 = vmatpush1.bf16.msra.mxu0 %v386
    %528 = vmatprep.subr.bf16.mxu0 0
    %529 = vmatpush1.bf16.msra.mxu0 %v387
    %530 = vmatprep.mubr.bf16.mxu0 %v51
    %531 = vmatmul.mubr.bf16.gmra.mrb[0].mxu0 %v50
    %v532 = vpop.f32.mrb[0].mxu0
    %v533 = vadd.f32 %v493, %v532
    %v534 = vpop.f32.mrb[0].mxu0
    %v535 = vpop.f32.mrb[0].mxu0
    %v536 = vpop.f32.mrb[0].mxu0
    %537 = vdwg.mxu0
    %538 = vmatprep.subr.bf16.mxu0 0
    %539 = vmatpush1.bf16.msra.mxu0 %v388
    %540 = vmatprep.subr.bf16.mxu0 0
    %541 = vmatpush1.bf16.msra.mxu0 %v389
    %542 = vmatprep.subr.bf16.mxu0 0
    %543 = vmatpush1.bf16.msra.mxu0 %v390
    %544 = vmatprep.subr.bf16.mxu0 0
    %545 = vmatpush1.bf16.msra.mxu0 %v391
    %546 = vmatprep.subr.bf16.mxu0 0
    %547 = vmatpush1.bf16.msra.mxu0 %v392
    %548 = vmatprep.subr.bf16.mxu0 0
    %549 = vmatpush1.bf16.msra.mxu0 %v393
    %550 = vmatprep.subr.bf16.mxu0 0
    %551 = vmatpush1.bf16.msra.mxu0 %v394
    %552 = vmatprep.subr.bf16.mxu0 0
    %553 = vmatpush1.bf16.msra.mxu0 %v395
    %554 = vmatprep.subr.bf16.mxu0 0
    %555 = vmatpush1.bf16.msra.mxu0 %v396
    %556 = vmatprep.subr.bf16.mxu0 0
    %557 = vmatpush1.bf16.msra.mxu0 %v397
    %558 = vmatprep.subr.bf16.mxu0 0
    %559 = vmatpush1.bf16.msra.mxu0 %v398
    %560 = vmatprep.subr.bf16.mxu0 0
    %561 = vmatpush1.bf16.msra.mxu0 %v399
    %562 = vmatprep.subr.bf16.mxu0 0
    %563 = vmatpush1.bf16.msra.mxu0 %v400
    %564 = vmatprep.subr.bf16.mxu0 0
    %565 = vmatpush1.bf16.msra.mxu0 %v401
    %566 = vmatprep.subr.bf16.mxu0 0
    %567 = vmatpush1.bf16.msra.mxu0 %v402
    %568 = vmatprep.subr.bf16.mxu0 0
    %569 = vmatpush1.bf16.msra.mxu0 %v403
    %570 = vmatprep.mubr.bf16.mxu0 %v53
    %571 = vmatmul.mubr.bf16.gmra.mrb[0].mxu0 %v52
    %v572 = vpop.f32.mrb[0].mxu0
    %v573 = vadd.f32 %v533, %v572
    %v574 = vpop.f32.mrb[0].mxu0
    %v575 = vpop.f32.mrb[0].mxu0
    %v576 = vpop.f32.mrb[0].mxu0
    %577 = vdwg.mxu0
    %578 = vmatprep.subr.bf16.mxu0 0
    %579 = vmatpush1.bf16.msra.mxu0 %v404
    %580 = vmatprep.subr.bf16.mxu0 0
    %581 = vmatpush1.bf16.msra.mxu0 0
    %582 = vmatprep.subr.bf16.mxu0 0
    %583 = vmatpush1.bf16.msra.mxu0 0
    %584 = vmatprep.subr.bf16.mxu0 0
    %585 = vmatpush1.bf16.msra.mxu0 0
    %586 = vmatprep.subr.bf16.mxu0 0
    %587 = vmatpush1.bf16.msra.mxu0 0
    %588 = vmatprep.subr.bf16.mxu0 0
    %589 = vmatpush1.bf16.msra.mxu0 0
    %590 = vmatprep.subr.bf16.mxu0 0
    %591 = vmatpush1.bf16.msra.mxu0 0
    %592 = vmatprep.subr.bf16.mxu0 0
    %593 = vmatpush1.bf16.msra.mxu0 0
    %594 = vmatprep.subr.bf16.mxu0 0
    %595 = vmatpush1.bf16.msra.mxu0 0
    %596 = vmatprep.subr.bf16.mxu0 0
    %597 = vmatpush1.bf16.msra.mxu0 0
    %598 = vmatprep.subr.bf16.mxu0 0
    %599 = vmatpush1.bf16.msra.mxu0 0
    %600 = vmatprep.subr.bf16.mxu0 0
    %601 = vmatpush1.bf16.msra.mxu0 0
    %602 = vmatprep.subr.bf16.mxu0 0
    %603 = vmatpush1.bf16.msra.mxu0 0
    %604 = vmatprep.subr.bf16.mxu0 0
    %605 = vmatpush1.bf16.msra.mxu0 0
    %606 = vmatprep.subr.bf16.mxu0 0
    %607 = vmatpush1.bf16.msra.mxu0 0
    %608 = vmatprep.subr.bf16.mxu0 0
    %609 = vmatpush1.bf16.msra.mxu0 0
    %610 = vmatprep.mubr.bf16.mxu0 0
    %611 = vmatmul.mubr.bf16.gmra.mrb[0].mxu0 %v456
    %v612 = vpop.f32.mrb[0].mxu0
    %v613 = vadd.f32 %v573, %v612
    %v614 = vpop.f32.mrb[0].mxu0
    %v615 = vpop.f32.mrb[0].mxu0
    %v616 = vpop.f32.mrb[0].mxu0
    %617 = vdwg.mxu0
    %v618 = vmax.f32 %v613, 0.0
    %v619 = vpack.c.bf16 %v618, %v618
    %v620 = vld [vmem:[%s3] sm:$0xf]
    %v621 = vld [vmem:[%s3 + $0x4] sm:$0xf]
    %v622 = vld [vmem:[%s3 + $0x8] sm:$0xf]
    %v623 = vld [vmem:[%s3 + $0xc] sm:$0xf]
    %v624 = vld [vmem:[%s3 + $0x10] sm:$0xf]
    %v625 = vld [vmem:[%s3 + $0x14] sm:$0xf]
    %v626 = vld [vmem:[%s3 + $0x18] sm:$0xf]
    %v627 = vld [vmem:[%s3 + $0x1c] sm:$0xf]
    %v628 = vld [vmem:[%s3 + $0x20] sm:$0xf]
    %v629 = vld [vmem:[%s3 + $0x24] sm:$0xf]
    %v630 = vld [vmem:[%s3 + $0x28] sm:$0xf]
    %v631 = vld [vmem:[%s3 + $0x2c] sm:$0xf]
    %v632 = vld [vmem:[%s3 + $0x30] sm:$0xf]
    %v633 = vld [vmem:[%s3 + $0x34] sm:$0xf]
    %v634 = vld [vmem:[%s3 + $0x38] sm:$0xf]
    %v635 = vld [vmem:[%s3 + $0x3c] sm:$0xf]
    %v636 = vld [vmem:[%s4] sm:$0x1]
    %v638 = vlaneseq
    %v639 = vshrl.u32 %v638, 7
    %v640 = vsub.s32 0, %v639
    %v641 = vrot.slane %v636, %v640
    %v659 = vunpack.c.l.b16 %v620
    %v660 = vunpack.c.l.b16 %v621
    %v661 = vunpack.c.l.b16 %v622
    %v662 = vunpack.c.l.b16 %v623
    %v663 = vunpack.c.l.b16 %v624
    %v664 = vunpack.c.l.b16 %v625
    %v665 = vunpack.c.l.b16 %v626
    %v666 = vunpack.c.l.b16 %v627
    %v667 = vunpack.c.l.b16 %v628
    %v668 = vunpack.c.l.b16 %v629
    %v669 = vunpack.c.l.b16 %v630
    %v670 = vunpack.c.l.b16 %v631
    %v671 = vunpack.c.l.b16 %v632
    %v672 = vunpack.c.l.b16 %v633
    %v673 = vunpack.c.l.b16 %v634
    %v674 = vunpack.c.l.b16 %v635
    %v675 = vpack.c.b16 %v660, %v659
    %v676 = vpack.c.b16 %v662, %v661
    %v677 = vpack.c.b16 %v664, %v663
    %v678 = vpack.c.b16 %v666, %v665
    %v679 = vpack.c.b16 %v668, %v667
    %v680 = vpack.c.b16 %v670, %v669
    %v681 = vpack.c.b16 %v672, %v671
    %v682 = vpack.c.b16 %v674, %v673
    %691 = vmatprep.subr.bf16.mxu0 0
    %692 = vmatpush1.bf16.msra.mxu0 %v675
    %693 = vmatprep.subr.bf16.mxu0 0
    %694 = vmatpush1.bf16.msra.mxu0 %v676
    %695 = vmatprep.subr.bf16.mxu0 0
    %696 = vmatpush1.bf16.msra.mxu0 %v677
    %697 = vmatprep.subr.bf16.mxu0 0
    %698 = vmatpush1.bf16.msra.mxu0 %v678
    %699 = vmatprep.subr.bf16.mxu0 0
    %700 = vmatpush1.bf16.msra.mxu0 %v679
    %701 = vmatprep.subr.bf16.mxu0 0
    %702 = vmatpush1.bf16.msra.mxu0 %v680
    %703 = vmatprep.subr.bf16.mxu0 0
    %704 = vmatpush1.bf16.msra.mxu0 %v681
    %705 = vmatprep.subr.bf16.mxu0 0
    %706 = vmatpush1.bf16.msra.mxu0 %v682
    %707 = vmatprep.subr.bf16.mxu0 0
    %708 = vmatpush1.bf16.msra.mxu0 0
    %709 = vmatprep.subr.bf16.mxu0 0
    %710 = vmatpush1.bf16.msra.mxu0 0
    %711 = vmatprep.subr.bf16.mxu0 0
    %712 = vmatpush1.bf16.msra.mxu0 0
    %713 = vmatprep.subr.bf16.mxu0 0
    %714 = vmatpush1.bf16.msra.mxu0 0
    %715 = vmatprep.subr.bf16.mxu0 0
    %716 = vmatpush1.bf16.msra.mxu0 0
    %717 = vmatprep.subr.bf16.mxu0 0
    %718 = vmatpush1.bf16.msra.mxu0 0
    %719 = vmatprep.subr.bf16.mxu0 0
    %720 = vmatpush1.bf16.msra.mxu0 0
    %721 = vmatprep.subr.bf16.mxu0 0
    %722 = vmatpush1.bf16.msra.mxu0 0
    %723 = vmatprep.mubr.bf16.mxu0 0
    %724 = vmatmul.mubr.bf16.gmra.mrb[0].mxu0 %v619
    %v725 = vpop.f32.mrb[0].mxu0
    %v726 = vadd.f32 %v641, %v725
    %v727 = vpop.f32.mrb[0].mxu0
    %v728 = vpop.f32.mrb[0].mxu0
    %v729 = vpop.f32.mrb[0].mxu0
    %730 = vdwg.mxu0
    %v731 = vmax.f32 %v726, 0.0
    %v732 = vpack.c.bf16 %v731, %v731
    %v733 = vld [vmem:[%s5] sm:$0xf]
    %v734 = vld [vmem:[%s5 + $0x4] sm:$0xf]
    %v735 = vld [vmem:[%s5 + $0x8] sm:$0xf]
    %v736 = vld [vmem:[%s5 + $0xc] sm:$0xf]
    %v737 = vld [vmem:[%s5 + $0x10] sm:$0xf]
    %v738 = vld [vmem:[%s5 + $0x14] sm:$0xf]
    %v739 = vld [vmem:[%s5 + $0x18] sm:$0xf]
    %v740 = vld [vmem:[%s5 + $0x1c] sm:$0xf]
    %v741 = vld [vmem:[%s5 + $0x20] sm:$0xf]
    %v742 = vld [vmem:[%s5 + $0x24] sm:$0xf]
    %v743 = vld [vmem:[%s5 + $0x28] sm:$0xf]
    %v744 = vld [vmem:[%s5 + $0x2c] sm:$0xf]
    %v745 = vld [vmem:[%s5 + $0x30] sm:$0xf]
    %v746 = vld [vmem:[%s5 + $0x34] sm:$0xf]
    %v747 = vld [vmem:[%s5 + $0x38] sm:$0xf]
    %v748 = vld [vmem:[%s5 + $0x3c] sm:$0xf]
    %v749 = vld [vmem:[%s6] sm:$0x1]
    %v751 = vlaneseq
    %v752 = vshrl.u32 %v751, 7
    %v753 = vsub.s32 0, %v752
    %v754 = vrot.slane %v749, %v753
    %v772 = vunpack.c.l.b16 %v733
    %v773 = vunpack.c.l.b16 %v734
    %v774 = vunpack.c.l.b16 %v735
    %v775 = vunpack.c.l.b16 %v736
    %v776 = vunpack.c.l.b16 %v737
    %v777 = vunpack.c.l.b16 %v738
    %v778 = vunpack.c.l.b16 %v739
    %v779 = vunpack.c.l.b16 %v740
    %v780 = vunpack.c.l.b16 %v741
    %v781 = vunpack.c.l.b16 %v742
    %v782 = vunpack.c.l.b16 %v743
    %v783 = vunpack.c.l.b16 %v744
    %v784 = vunpack.c.l.b16 %v745
    %v785 = vunpack.c.l.b16 %v746
    %v786 = vunpack.c.l.b16 %v747
    %v787 = vunpack.c.l.b16 %v748
    %v788 = vpack.c.b16 %v773, %v772
    %v789 = vpack.c.b16 %v775, %v774
    %v790 = vpack.c.b16 %v777, %v776
    %v791 = vpack.c.b16 %v779, %v778
    %v792 = vpack.c.b16 %v781, %v780
    %v793 = vpack.c.b16 %v783, %v782
    %v794 = vpack.c.b16 %v785, %v784
    %v795 = vpack.c.b16 %v787, %v786
    %804 = vmatprep.subr.bf16.mxu0 0
    %805 = vmatpush1.bf16.msra.mxu0 %v788
    %806 = vmatprep.subr.bf16.mxu0 0
    %807 = vmatpush1.bf16.msra.mxu0 %v789
    %808 = vmatprep.subr.bf16.mxu0 0
    %809 = vmatpush1.bf16.msra.mxu0 %v790
    %810 = vmatprep.subr.bf16.mxu0 0
    %811 = vmatpush1.bf16.msra.mxu0 %v791
    %812 = vmatprep.subr.bf16.mxu0 0
    %813 = vmatpush1.bf16.msra.mxu0 %v792
    %814 = vmatprep.subr.bf16.mxu0 0
    %815 = vmatpush1.bf16.msra.mxu0 %v793
    %816 = vmatprep.subr.bf16.mxu0 0
    %817 = vmatpush1.bf16.msra.mxu0 %v794
    %818 = vmatprep.subr.bf16.mxu0 0
    %819 = vmatpush1.bf16.msra.mxu0 %v795
    %820 = vmatprep.subr.bf16.mxu0 0
    %821 = vmatpush1.bf16.msra.mxu0 0
    %822 = vmatprep.subr.bf16.mxu0 0
    %823 = vmatpush1.bf16.msra.mxu0 0
    %824 = vmatprep.subr.bf16.mxu0 0
    %825 = vmatpush1.bf16.msra.mxu0 0
    %826 = vmatprep.subr.bf16.mxu0 0
    %827 = vmatpush1.bf16.msra.mxu0 0
    %828 = vmatprep.subr.bf16.mxu0 0
    %829 = vmatpush1.bf16.msra.mxu0 0
    %830 = vmatprep.subr.bf16.mxu0 0
    %831 = vmatpush1.bf16.msra.mxu0 0
    %832 = vmatprep.subr.bf16.mxu0 0
    %833 = vmatpush1.bf16.msra.mxu0 0
    %834 = vmatprep.subr.bf16.mxu0 0
    %835 = vmatpush1.bf16.msra.mxu0 0
    %836 = vmatprep.mubr.bf16.mxu0 0
    %837 = vmatmul.mubr.bf16.gmra.mrb[0].mxu0 %v732
    %v838 = vpop.f32.mrb[0].mxu0
    %v839 = vadd.f32 %v754, %v838
    %v840 = vpop.f32.mrb[0].mxu0
    %v841 = vpop.f32.mrb[0].mxu0
    %v842 = vpop.f32.mrb[0].mxu0
    %843 = vdwg.mxu0
    %844 = vmax.xlane.f32.xlu0 %v839
    %v845 = vpop.xlane.xlu0 %844
    %v846 = vsub.f32 %v839, %v845
    %v847 = vmul.f32 %v846, 1.442695
    %v848 = vpow.pop %v847
    %849 = vadd.xlane.f32.xlu0 %v848
    %v850 = vpop.xlane.xlu0 %849
    %v851 = vrcp.pop %v850
    %v852 = vmul.f32 %v848, %v851
    %853 = vst [vmem:[%s7] sm:$0xff] %v852
    // Predicated region
    $region34: #{mnist_mlp_forward.1} parent=1 // pred_check
      _
    $region35: #{mnist_mlp_forward.1} parent=1 // pred_check_branch
      %855 = sbr.rel (0) target = $region37
    $region36: #{mnist_mlp_forward.1} parent=1 // pred_region
      _
    $region37: #{mnist_mlp_forward.1} parent=1 // pred_fallthru
      _
    // Predicated region
    $region38: #{mnist_mlp_forward.1} parent=1 // pred_check
      _
    $region39: #{mnist_mlp_forward.1} parent=1 // pred_check_branch
      %857 = sbr.rel (0) target = $region41
    $region40: #{mnist_mlp_forward.1} parent=1 // pred_region
      _
    $region41: #{mnist_mlp_forward.1} parent=1 // pred_fallthru
      _
    %858 = vsyncpa [#allocation3], 1

</llo_original>
